<compile_context>
chip_gen: v6e
topology: v6e:2x2x1
jax: 0.10.0
libtpu: 0.0.40
codegen_flags: <defaults>
</compile_context>

<pallas_src>
import jax
import jax.numpy as jnp
from jax import lax
from jax.experimental import pallas as pl
from jax.experimental.pallas import tpu as pltpu

BN_EPS = 1e-5
H1, H2 = 256, 128      # hidden widths of the FC head (from the module spec)


def _round_up(x, m):
    return ((x + m - 1) // m) * m


def _choose_tk(f_padded_128, tk_max):
    """Pick a K tile (multiple of 128) minimizing (#steps, padded waste)."""
    cap = min(f_padded_128, _round_up(tk_max, 128))
    candidates = range(128, cap + 1, 128)
    def key(tk):
        steps = -(-f_padded_128 // tk)
        return (steps, steps * tk - f_padded_128, -tk)
    tk = min(candidates, key=key)
    fp = -(-f_padded_128 // tk) * tk
    return tk, fp


def _choose_tb(batch, tb_max):
    """Batch tile: multiple of 16 (bf16 sublanes), balanced to minimize padding."""
    if batch <= tb_max:
        tb = _round_up(max(batch, 1), 16)
        return tb, tb
    nb = -(-batch // tb_max)
    tb = _round_up(-(-batch // nb), 16)
    return tb, nb * tb


# --------------------------------------------------------------------------
# Kernel: streamed Linear(F,256) (BN folded) + fused epilogue (ReLU, Linear
# (256,128)+BN+ReLU, Linear(128,1)).  Grid = (K tiles [outer], batch tiles).
# --------------------------------------------------------------------------
def fc_head_kernel(z_ref, w1_ref, b1_ref, w2_ref, b2_ref, w3_ref, b3_ref,
                   out_ref, acc_ref):
    k = pl.program_id(0)                      # reduction axis (outer)
    i = pl.program_id(1)                      # batch-tile axis (inner)
    tb = z_ref.shape[0]
    row0 = pl.multiple_of(i * tb, tb)
    rows = pl.ds(row0, tb)

    @pl.when(k == 0)
    def _():
        acc_ref[rows, :] = jnp.zeros((tb, acc_ref.shape[1]), acc_ref.dtype)

    # Streamed K-tile of Linear(F, 256); BatchNorm already folded into w1/b1.
    acc_ref[rows, :] += jnp.dot(z_ref[...], w1_ref[...],
                                preferred_element_type=jnp.float32)

    @pl.when(k == pl.num_programs(0) - 1)
    def _():
        # Epilogue once per batch tile: bias + ReLU, then layers 2 and 3.
        h1 = jnp.maximum(acc_ref[rows, :] + b1_ref[...], 0.0)          # (tb, 256)
        # Dropout(p=0.75) is identity at inference time.
        h2 = jnp.dot(h1.astype(jnp.bfloat16), w2_ref[...],
                     preferred_element_type=jnp.float32) + b2_ref[...]
        h2 = jnp.maximum(h2, 0.0)                                      # (tb, 128)
        # Linear(128, 1) as a VPU/XLU lane reduction (avoids an N=1 MXU matmul).
        out_ref[rows, :] = (jnp.sum(h2 * w3_ref[...], axis=-1, keepdims=True)
                            + b3_ref[...]).astype(out_ref.dtype)


def prepare_fc_head(params, *, tk_max=8192):
    """One-time prep for the frozen head: fold BN, cast to bf16, pad w1."""
    F = params["w1"].shape[0]
    s1 = params["g1"] * lax.rsqrt(params["v1"] + BN_EPS)               # (1, 256)
    w1 = (params["w1"] * s1).astype(jnp.bfloat16)                      # (F, 256)
    b1 = ((params["b1"] - params["m1"]) * s1 + params["be1"]).astype(jnp.float32)
    s2 = params["g2"] * lax.rsqrt(params["v2"] + BN_EPS)               # (1, 128)
    w2 = (params["w2"] * s2).astype(jnp.bfloat16)                      # (256, 128)
    b2 = ((params["b2"] - params["m2"]) * s2 + params["be2"]).astype(jnp.float32)
    w3 = params["w3"].reshape(1, H2).astype(jnp.float32)               # row vector
    b3 = params["b3"].reshape(1, 1).astype(jnp.float32)

    TK, Fp = _choose_tk(_round_up(F, 128), tk_max)
    if Fp != F:
        w1 = jnp.pad(w1, ((0, Fp - F), (0, 0)))                        # exact (zeros)
    return {"w1": w1, "b1": b1, "w2": w2, "b2": b2, "w3": w3, "b3": b3,
            "F": F, "Fp": Fp, "TK": TK}


def fc_head(z, prep, *, tb_max=512):
    """z: (B, F) float32 latent; prep: output of prepare_fc_head (cached)."""
    B, F = z.shape
    assert F == prep["F"], (F, prep["F"])
    Fp, TK = prep["Fp"], prep["TK"]
    TB, Bp = _choose_tb(B, tb_max)

    zb = z.astype(jnp.bfloat16)
    if Bp != B or Fp != F:
        zb = jnp.pad(zb, ((0, Bp - B), (0, Fp - F)))                   # exact (zeros)

    grid = (Fp // TK, Bp // TB)           # K (reduction) outer, batch inner

    # VMEM budget derived from actual buffers (double-buffered streams + acc).
    vmem_bytes = (2 * TB * TK * 2 + 2 * TK * H1 * 2 + Bp * H1 * 4 + Bp * 512
                  + 4 * (H1 * H2 * 2 + (H1 + 2 * H2 + 2) * 4))
    vmem_limit = int(min(max(vmem_bytes * 3 // 2 + (4 << 20), 16 << 20), 60 << 20))

    cost = pl.CostEstimate(
        flops=int(2 * Bp * Fp * H1 + 2 * Bp * H1 * H2 + 2 * Bp * H2),
        transcendentals=0,
        bytes_accessed=int(Bp * Fp * 2 + Fp * H1 * 2 + H1 * H2 * 2
                           + (H1 + 2 * H2 + 2) * 4 + Bp * 4))

    out = pl.pallas_call(
        fc_head_kernel,
        out_shape=jax.ShapeDtypeStruct((Bp, 1), jnp.float32),
        grid=grid,
        in_specs=[
            pl.BlockSpec((TB, TK), lambda k, i: (i, k)),        # z tile
            pl.BlockSpec((TK, H1), lambda k, i: (k, 0)),        # w1 K-tile (streamed once)
            pl.BlockSpec((1, H1), lambda k, i: (0, 0)),         # b1 (BN folded)
            pl.BlockSpec((H1, H2), lambda k, i: (0, 0)),        # w2 (BN folded)
            pl.BlockSpec((1, H2), lambda k, i: (0, 0)),         # b2
            pl.BlockSpec((1, H2), lambda k, i: (0, 0)),         # w3 row
            pl.BlockSpec((1, 1), lambda k, i: (0, 0)),          # b3
        ],
        # Whole output column resident in VMEM; written back to HBM once.
        out_specs=pl.BlockSpec((Bp, 1), lambda k, i: (0, 0)),
        scratch_shapes=[pltpu.VMEM((Bp, H1), jnp.float32)],
        compiler_params=pltpu.CompilerParams(
            dimension_semantics=("arbitrary", "arbitrary"),
            vmem_limit_bytes=vmem_limit),
        cost_estimate=cost,
    )(zb, prep["w1"], prep["b1"], prep["w2"], prep["b2"], prep["w3"], prep["b3"])
    return out[:B]


def stub_vae_encoder(x, proj):
    # TODO(synk): the real frozen VAE encoder is an external module with no
    # definition in the source; this deterministic stride-8 patch embedding
    # stands in for it (plain-JAX glue, not the kernel hot path).
    B, C, H, W = x.shape
    eh, ew = H // 8, W // 8
    p = x.reshape(B, C, eh, 8, ew, 8).transpose(0, 2, 4, 1, 3, 5).reshape(B, eh, ew, C * 64)
    lat = jnp.einsum("bhwc,cd->bhwd", p, proj)          # (B, eh, ew, 8)
    return lat.transpose(0, 3, 1, 2)                    # (B, 8, eh, ew) NCHW latent


def furry_classifier_forward(x, proj, prep):
    lat = stub_vae_encoder(x, proj)                     # (B, 8, H/8, W/8)
    z = lat.reshape(lat.shape[0], -1)                   # nn.Flatten, NCHW order
    return fc_head(z.astype(jnp.float32), prep)


def init_params(key, flattened_size):
    ks = jax.random.split(key, 8)
    n = lambda k, s, scale: (scale * jax.random.normal(k, s)).astype(jnp.float32)
    return {
        # torch Linear stores (out, in); pre-transposed to (in, out) for x @ W.
        "w1": n(ks[0], (flattened_size, 256), 0.02),
        "b1": n(ks[1], (1, 256), 0.02),
        "g1": jnp.ones((1, 256), jnp.float32),
        "be1": jnp.zeros((1, 256), jnp.float32),
        "m1": n(ks[2], (1, 256), 0.1),
        "v1": 0.5 + jax.random.uniform(ks[3], (1, 256), jnp.float32),
        "w2": n(ks[4], (256, 128), 0.02),
        "b2": n(ks[5], (1, 128), 0.02),
        "g2": jnp.ones((1, 128), jnp.float32),
        "be2": jnp.zeros((1, 128), jnp.float32),
        "m2": n(ks[6], (1, 128), 0.1),
        "v2": 0.5 + jax.random.uniform(ks[7], (1, 128), jnp.float32),
        "w3": n(jax.random.fold_in(key, 99), (128, 1), 0.02),
        "b3": jnp.zeros((1, 1), jnp.float32),
    }


if __name__ == "__main__":
    key = jax.random.PRNGKey(0)
    kx, kp, kproj = jax.random.split(key, 3)

    B, C, IMG = 2, 3, 32                                 # img_size=32 -> encoder_dim=4
    flattened_size = int(8 * (IMG // 8) * (IMG // 8))    # 8 * 4 * 4 = 128

    x = jax.random.normal(kx, (B, C, IMG, IMG), jnp.float32)   # NCHW, like torch
    proj = 0.05 * jax.random.normal(kproj, (C * 64, 8), jnp.float32)
    params = init_params(kp, flattened_size)

    # One-time weight prep for the frozen head (BN fold + bf16 cast + K pad).
    prep = jax.tree_util.tree_map(
        lambda v: jax.block_until_ready(v) if isinstance(v, jax.Array) else v,
        prepare_fc_head(params))

    pred = furry_classifier_forward(x, proj, prep)
    jax.block_until_ready(pred)
    assert pred.shape == (B, 1) and pred.dtype == jnp.float32

    # --- Reference 1: exact kernel math (BN folded + bf16 quantized inputs). ---
    lat = stub_vae_encoder(x, proj)
    z = lat.reshape(B, -1).astype(jnp.float32)
    hp = jax.lax.Precision.HIGHEST
    s1 = params["g1"] * jax.lax.rsqrt(params["v1"] + BN_EPS)
    w1q = (params["w1"] * s1).astype(jnp.bfloat16).astype(jnp.float32)
    b1f = (params["b1"] - params["m1"]) * s1 + params["be1"]
    s2 = params["g2"] * jax.lax.rsqrt(params["v2"] + BN_EPS)
    w2q = (params["w2"] * s2).astype(jnp.bfloat16).astype(jnp.float32)
    b2f = (params["b2"] - params["m2"]) * s2 + params["be2"]
    zq = z.astype(jnp.bfloat16).astype(jnp.float32)
    h1q = jnp.maximum(jnp.dot(zq, w1q, precision=hp) + b1f, 0.0)
    h2q = jnp.maximum(
        jnp.dot(h1q.astype(jnp.bfloat16).astype(jnp.float32), w2q, precision=hp) + b2f, 0.0)
    ref_q = jnp.dot(h2q, params["w3"], precision=hp) + params["b3"]
    assert jnp.allclose(pred, ref_q, atol=1e-3, rtol=1e-3), "kernel vs folded/bf16 reference"

    # --- Reference 2: original module semantics in full f32 (BN unfolded). ---
    h1 = jnp.dot(z, params["w1"], precision=hp) + params["b1"]
    h1 = (h1 - params["m1"]) / jnp.sqrt(params["v1"] + BN_EPS) * params["g1"] + params["be1"]
    h1 = jnp.maximum(h1, 0.0)
    h2 = jnp.dot(h1, params["w2"], precision=hp) + params["b2"]
    h2 = (h2 - params["m2"]) / jnp.sqrt(params["v2"] + BN_EPS) * params["g2"] + params["be2"]
    h2 = jnp.maximum(h2, 0.0)
    ref = jnp.dot(h2, params["w3"], precision=hp) + params["b3"]
    assert jnp.allclose(pred, ref, atol=1e-2, rtol=1e-2), "kernel vs f32 module reference"

    print("KERNEL_OK")
</pallas_src>

<mosaic_0001>
module attributes {stable_mosaic.version = 11 : i64} {
  func.func @fc_head_kernel(%arg0: i32, %arg1: i32, %arg2: memref<16x128xbf16, #tpu.memory_space<vmem>>, %arg3: memref<128x256xbf16, #tpu.memory_space<vmem>>, %arg4: memref<1x256xf32, #tpu.memory_space<vmem>>, %arg5: memref<256x128xbf16, #tpu.memory_space<vmem>>, %arg6: memref<1x128xf32, #tpu.memory_space<vmem>>, %arg7: memref<1x128xf32, #tpu.memory_space<vmem>>, %arg8: memref<1x1xf32, #tpu.memory_space<vmem>>, %arg9: memref<16x1xf32, #tpu.memory_space<vmem>>, %arg10: memref<16x256xf32, #tpu.memory_space<vmem>>) attributes {dimension_semantics = [#tpu.dimension_semantics<arbitrary>, #tpu.dimension_semantics<arbitrary>], iteration_bounds = array<i64: 1, 1>, scalar_prefetch = 0 : i64, scratch_operands = 1 : i64, tpu.core_type = #tpu.core_type<tc>, window_params = [{transform_indices = @transform_0, window_bounds = array<i64: 16, 128>}, {transform_indices = @transform_1, window_bounds = array<i64: 128, 256>}, {pipeline_mode = #tpu.pipeline_mode<synchronous>, transform_indices = @transform_2, window_bounds = array<i64: 1, 256>}, {pipeline_mode = #tpu.pipeline_mode<synchronous>, transform_indices = @transform_3, window_bounds = array<i64: 256, 128>}, {pipeline_mode = #tpu.pipeline_mode<synchronous>, transform_indices = @transform_4, window_bounds = array<i64: 1, 128>}, {pipeline_mode = #tpu.pipeline_mode<synchronous>, transform_indices = @transform_5, window_bounds = array<i64: 1, 128>}, {pipeline_mode = #tpu.pipeline_mode<synchronous>, transform_indices = @transform_6, window_bounds = array<i64: 1, 1>}, {pipeline_mode = #tpu.pipeline_mode<synchronous>, transform_indices = @transform_7, window_bounds = array<i64: 16, 1>}]} {
    %c16_i32 = arith.constant 16 : i32
    %0 = arith.muli %arg1, %c16_i32 : i32
    %1 = tpu.assume_multiple %0, 16 : i32
    %c0_i32 = arith.constant 0 : i32
    %2 = arith.cmpi eq, %arg0, %c0_i32 : i32
    %3 = arith.extui %2 : i1 to i32
    %c0_i32_0 = arith.constant 0 : i32
    %4 = arith.cmpi ne, %3, %c0_i32_0 : i32
    scf.if %4 {
      %cst_8 = arith.constant 0.000000e+00 : f32
      %16 = vector.broadcast %cst_8 : f32 to vector<16x256xf32>
      %17 = arith.index_cast %1 : i32 to index
      %c0_9 = arith.constant 0 : index
      %18 = vector.load %arg10[%17, %c0_9] : memref<16x256xf32, #tpu.memory_space<vmem>>, vector<16x256xf32>
      tpu.vector_store %arg10[%17, %c0_9], %16 {strides = array<i32>} : memref<16x256xf32, #tpu.memory_space<vmem>>, vector<16x256xf32>,
    } else {
    }
    %5 = arith.index_cast %1 : i32 to index
    %c0 = arith.constant 0 : index
    %6 = vector.load %arg10[%5, %c0] : memref<16x256xf32, #tpu.memory_space<vmem>>, vector<16x256xf32>
    %c0_1 = arith.constant 0 : index
    %c0_2 = arith.constant 0 : index
    %7 = vector.load %arg2[%c0_1, %c0_2] : memref<16x128xbf16, #tpu.memory_space<vmem>>, vector<16x128xbf16>
    %c0_3 = arith.constant 0 : index
    %c0_4 = arith.constant 0 : index
    %8 = vector.load %arg3[%c0_3, %c0_4] : memref<128x256xbf16, #tpu.memory_space<vmem>>, vector<128x256xbf16>
    %cst = arith.constant dense<0.000000e+00> : vector<16x256xf32>
    %9 = tpu.matmul %7, %8, %cst {dimension_numbers = #tpu.dot_dimension_numbers<[1], [0], [0], [1], [0, 0, 1, 1], [], []>} : vector<16x128xbf16>, vector<128x256xbf16>, vector<16x256xf32> -> vector<16x256xf32>
    %10 = arith.addf %6, %9 : vector<16x256xf32>
    %11 = arith.index_cast %1 : i32 to index
    %c0_5 = arith.constant 0 : index
    %12 = vector.load %arg10[%11, %c0_5] : memref<16x256xf32, #tpu.memory_space<vmem>>, vector<16x256xf32>
    tpu.vector_store %arg10[%11, %c0_5], %10 {strides = array<i32>} : memref<16x256xf32, #tpu.memory_space<vmem>>, vector<16x256xf32>,
    %c0_i32_6 = arith.constant 0 : i32
    %13 = arith.cmpi eq, %arg0, %c0_i32_6 : i32
    %14 = arith.extui %13 : i1 to i32
    %c0_i32_7 = arith.constant 0 : i32
    %15 = arith.cmpi ne, %14, %c0_i32_7 : i32
    scf.if %15 {
      %16 = arith.index_cast %1 : i32 to index
      %c0_8 = arith.constant 0 : index
      %17 = vector.load %arg10[%16, %c0_8] : memref<16x256xf32, #tpu.memory_space<vmem>>, vector<16x256xf32>
      %c0_9 = arith.constant 0 : index
      %c0_10 = arith.constant 0 : index
      %18 = vector.load %arg4[%c0_9, %c0_10] : memref<1x256xf32, #tpu.memory_space<vmem>>, vector<1x256xf32>
      %19 = vector.broadcast %18 : vector<1x256xf32> to vector<16x256xf32>
      %20 = arith.addf %17, %19 : vector<16x256xf32>
      %cst_11 = arith.constant 0.000000e+00 : f32
      %21 = vector.broadcast %cst_11 : f32 to vector<16x256xf32>
      %22 = arith.maximumf %20, %21 : vector<16x256xf32>
      %23 = arith.truncf %22 : vector<16x256xf32> to vector<16x256xbf16>
      %c0_12 = arith.constant 0 : index
      %c0_13 = arith.constant 0 : index
      %24 = vector.load %arg5[%c0_12, %c0_13] : memref<256x128xbf16, #tpu.memory_space<vmem>>, vector<256x128xbf16>
      %cst_14 = arith.constant dense<0.000000e+00> : vector<16x128xf32>
      %25 = tpu.matmul %23, %24, %cst_14 {dimension_numbers = #tpu.dot_dimension_numbers<[1], [0], [0], [1], [0, 0, 1, 1], [], []>} : vector<16x256xbf16>, vector<256x128xbf16>, vector<16x128xf32> -> vector<16x128xf32>
      %c0_15 = arith.constant 0 : index
      %c0_16 = arith.constant 0 : index
      %26 = vector.load %arg6[%c0_15, %c0_16] : memref<1x128xf32, #tpu.memory_space<vmem>>, vector<1x128xf32>
      %27 = vector.broadcast %26 : vector<1x128xf32> to vector<16x128xf32>
      %28 = arith.addf %25, %27 : vector<16x128xf32>
      %cst_17 = arith.constant 0.000000e+00 : f32
      %29 = vector.broadcast %cst_17 : f32 to vector<16x128xf32>
      %30 = arith.maximumf %28, %29 : vector<16x128xf32>
      %c0_18 = arith.constant 0 : index
      %c0_19 = arith.constant 0 : index
      %31 = vector.load %arg7[%c0_18, %c0_19] : memref<1x128xf32, #tpu.memory_space<vmem>>, vector<1x128xf32>
      %32 = vector.broadcast %31 : vector<1x128xf32> to vector<16x128xf32>
      %33 = arith.mulf %30, %32 : vector<16x128xf32>
      %cst_20 = arith.constant dense<0.000000e+00> : vector<16xf32>
      %34 = vector.multi_reduction <add>, %33, %cst_20 [1] : vector<16x128xf32> to vector<16xf32>
      %35 = vector.shape_cast %34 : vector<16xf32> to vector<16x1xf32>
      %c0_21 = arith.constant 0 : index
      %c0_22 = arith.constant 0 : index
      %36 = vector.load %arg8[%c0_21, %c0_22] : memref<1x1xf32, #tpu.memory_space<vmem>>, vector<1x1xf32>
      %37 = vector.broadcast %36 : vector<1x1xf32> to vector<16x1xf32>
      %38 = arith.addf %35, %37 : vector<16x1xf32>
      %39 = arith.index_cast %1 : i32 to index
      %c0_23 = arith.constant 0 : index
      %40 = vector.load %arg9[%39, %c0_23] : memref<16x1xf32, #tpu.memory_space<vmem>>, vector<16x1xf32>
      tpu.vector_store %arg9[%39, %c0_23], %38 {strides = array<i32>} : memref<16x1xf32, #tpu.memory_space<vmem>>, vector<16x1xf32>,
    } else {
    }
    return
  }
  func.func @transform_0(%arg0: i32, %arg1: i32) -> (i32, i32) {
    %c0_i32 = arith.constant 0 : i32
    return %arg1, %arg0 : i32, i32
  }
  func.func @transform_1(%arg0: i32, %arg1: i32) -> (i32, i32) {
    %c0_i32 = arith.constant 0 : i32
    %c0_i32_0 = arith.constant 0 : i32
    return %arg0, %c0_i32 : i32, i32
  }
  func.func @transform_2(%arg0: i32, %arg1: i32) -> (i32, i32) {
    %c0_i32 = arith.constant 0 : i32
    %c0_i32_0 = arith.constant 0 : i32
    %c0_i32_1 = arith.constant 0 : i32
    return %c0_i32, %c0_i32_0 : i32, i32
  }
  func.func @transform_3(%arg0: i32, %arg1: i32) -> (i32, i32) {
    %c0_i32 = arith.constant 0 : i32
    %c0_i32_0 = arith.constant 0 : i32
    %c0_i32_1 = arith.constant 0 : i32
    return %c0_i32, %c0_i32_0 : i32, i32
  }
  func.func @transform_4(%arg0: i32, %arg1: i32) -> (i32, i32) {
    %c0_i32 = arith.constant 0 : i32
    %c0_i32_0 = arith.constant 0 : i32
    %c0_i32_1 = arith.constant 0 : i32
    return %c0_i32, %c0_i32_0 : i32, i32
  }
  func.func @transform_5(%arg0: i32, %arg1: i32) -> (i32, i32) {
    %c0_i32 = arith.constant 0 : i32
    %c0_i32_0 = arith.constant 0 : i32
    %c0_i32_1 = arith.constant 0 : i32
    return %c0_i32, %c0_i32_0 : i32, i32
  }
  func.func @transform_6(%arg0: i32, %arg1: i32) -> (i32, i32) {
    %c0_i32 = arith.constant 0 : i32
    %c0_i32_0 = arith.constant 0 : i32
    %c0_i32_1 = arith.constant 0 : i32
    return %c0_i32, %c0_i32_0 : i32, i32
  }
  func.func @transform_7(%arg0: i32, %arg1: i32) -> (i32, i32) {
    %c0_i32 = arith.constant 0 : i32
    %c0_i32_0 = arith.constant 0 : i32
    %c0_i32_1 = arith.constant 0 : i32
    return %c0_i32, %c0_i32_0 : i32, i32
  }
}

</mosaic_0001>

<llo_original>
// kernel: tpu_custom_call.1
$region0: #{tpu_custom_call.1}
  #allocation0 [shape = 'u32[]', space=smem, size = 0x4, offset = 0x4, fixed_abs, tag = 'smem constant byte address 0x4 - core index']
  #allocation1 [shape = 'u32[144,128]{1,0:T(1,128)}', space=vmem, size = 0x12000, scoped, tag = 'internal scratch']
  #allocation2 [shape = 'f32[16,256]{1,0:T(8,128)}', space=vmem, size = 0x4000, scoped, tag = 'scratch operand']
  #allocation3 [shape = 'f32[1,1]{1,0:T(1,128)S(1)}', space=vmem, size = 0x200, scoped, tag = 'scoped memory for tpu_custom_call.1']
  %s0 = inlined_call_operand.hbm [shape: bf16[16,128], index: 0, kind: input, shape index: {}]
  %s1 = inlined_call_operand.hbm [shape: bf16[128,256], index: 1, kind: input, shape index: {}]
  %s2 = inlined_call_operand.vmem [shape: f32[1,256], index: 2, kind: input, shape index: {}]
  %s3 = inlined_call_operand.hbm [shape: bf16[256,128], index: 3, kind: input, shape index: {}]
  %s4 = inlined_call_operand.vmem [shape: f32[1,128], index: 4, kind: input, shape index: {}]
  %s5 = inlined_call_operand.vmem [shape: f32[1,128], index: 5, kind: input, shape index: {}]
  %s6 = inlined_call_operand.<no memory space> [shape: f32[1,1], index: 6, kind: input, shape index: {}]
  %s7 = inlined_call_operand.vmem [shape: f32[16,1], index: 7, kind: output, shape index: {}]
  %s8 = sld [smem:[#allocation0]]
  $region58: #{tpu_custom_call.1} parent=0
    _
  %s10 = ssub.s32 1, %s8
  %s11 = scalar_select 0, %s10, %s8
  %v12 = vstv %s6
  %13 = vst [vmem:[#allocation3] sm:$0x1] %v12
  $region1: #{tpu_custom_call.1} parent=0
    #allocation4 [shape = 'u8[4096]{0}', space=vmem, size = 0x1000, scoped, tag = 'input window, operand 0, single buffered']
    #allocation5 [shape = 's32[1]{0}', space=sflag, size = 0x4, scoped, tag = 'scoped memory for tpu_custom_call.1']
    #allocation6 [shape = 'u8[65536]{0}', space=vmem, size = 0x10000, scoped, tag = 'input window, operand 1, single buffered']
    #allocation7 [shape = 's32[1]{0}', space=sflag, size = 0x4, scoped, tag = 'scoped memory for tpu_custom_call.1']
    #allocation8 [shape = 'u8[65536]{0}', space=vmem, size = 0x10000, scoped, tag = 'input window, operand 3, single buffered']
    %14 = vsyncpa [#allocation5], 0
    %15 = vsyncpa [#allocation7], 0
    // Predicated region
    $region2: #{tpu_custom_call.1} parent=1 // pred_check
      _
    $region3: #{tpu_custom_call.1} parent=1 // pred_check_branch
      %17 = sbr.rel (0) target = $region5
    $region4: #{tpu_custom_call.1} parent=1 // pred_region
      %s19 = ssub.s32 128, 128
      %20 = vsyncadd [#allocation5], %s19
      %s21 = sshll.u32 [#allocation4], 4
      %s22 = int_to_ptr.vmem [resolvable:$true] %s21
      %27 = dma.hbm_to_vmem [thread:$0]  %s0, 128, %s22, [#allocation5], 64, 64, 4
    $region5: #{tpu_custom_call.1} parent=1 // pred_fallthru
      _
    // Predicated region
    $region6: #{tpu_custom_call.1} parent=1 // pred_check
      _
    $region7: #{tpu_custom_call.1} parent=1 // pred_check_branch
      %29 = sbr.rel (0) target = $region9
    $region8: #{tpu_custom_call.1} parent=1 // pred_region
      %s31 = ssub.s32 2048, 2048
      %32 = vsyncadd [#allocation7], %s31
      %s33 = sshll.u32 [#allocation6], 4
      %s34 = int_to_ptr.vmem [resolvable:$true] %s33
      %39 = dma.hbm_to_vmem [thread:$0]  %s1, 2048, %s34, [#allocation7], 128, 128, 8
    $region9: #{tpu_custom_call.1} parent=1 // pred_fallthru
      _
    // Predicated region
    $region10: #{tpu_custom_call.1} parent=1 // pred_check
      _
    $region11: #{tpu_custom_call.1} parent=1 // pred_check_branch
      %41 = sbr.rel (0) target = $region13
    $region12: #{tpu_custom_call.1} parent=1 // pred_region
      _
    $region13: #{tpu_custom_call.1} parent=1 // pred_fallthru
      _
    // Predicated region
    $region14: #{tpu_custom_call.1} parent=1 // pred_check
      _
    $region15: #{tpu_custom_call.1} parent=1 // pred_check_branch
      %43 = sbr.rel (0) target = $region17
    $region16: #{tpu_custom_call.1} parent=1 // pred_region
      %s45 = ssub.s32 2048, 2048
      %46 = vsyncadd [#allocation7], %s45
      %s47 = sshll.u32 [#allocation8], 4
      %s48 = int_to_ptr.vmem [resolvable:$true] %s47
      %53 = dma.hbm_to_vmem [thread:$0]  %s3, 2048, %s48, [#allocation7], 64, 64, 4
    $region17: #{tpu_custom_call.1} parent=1 // pred_fallthru
      _
    // Predicated region
    $region18: #{tpu_custom_call.1} parent=1 // pred_check
      _
    $region19: #{tpu_custom_call.1} parent=1 // pred_check_branch
      %55 = sbr.rel (0) target = $region21
    $region20: #{tpu_custom_call.1} parent=1 // pred_region
      _
    $region21: #{tpu_custom_call.1} parent=1 // pred_fallthru
      _
    // Predicated region
    $region22: #{tpu_custom_call.1} parent=1 // pred_check
      _
    $region23: #{tpu_custom_call.1} parent=1 // pred_check_branch
      %57 = sbr.rel (0) target = $region25
    $region24: #{tpu_custom_call.1} parent=1 // pred_region
      _
    $region25: #{tpu_custom_call.1} parent=1 // pred_fallthru
      _
    // Predicated region
    $region26: #{tpu_custom_call.1} parent=1 // pred_check
      _
    $region27: #{tpu_custom_call.1} parent=1 // pred_check_branch
      %59 = sbr.rel (0) target = $region29
    $region28: #{tpu_custom_call.1} parent=1 // pred_region
      _
    $region29: #{tpu_custom_call.1} parent=1 // pred_fallthru
      _
    // Predicated region
    $region30: #{tpu_custom_call.1} parent=1 // pred_check
      _
    $region31: #{tpu_custom_call.1} parent=1 // pred_check_branch
      %61 = sbr.rel (0) target = $region33
    $region32: #{tpu_custom_call.1} parent=1 // pred_region
      %62 = dma.done [#allocation5], 128
    $region33: #{tpu_custom_call.1} parent=1 // pred_fallthru
      _
    // Predicated region
    $region34: #{tpu_custom_call.1} parent=1 // pred_check
      _
    $region35: #{tpu_custom_call.1} parent=1 // pred_check_branch
      %64 = sbr.rel (0) target = $region37
    $region36: #{tpu_custom_call.1} parent=1 // pred_region
      %65 = dma.done [#allocation7], 2048
    $region37: #{tpu_custom_call.1} parent=1 // pred_fallthru
      _
    // Predicated region
    $region38: #{tpu_custom_call.1} parent=1 // pred_check
      _
    $region39: #{tpu_custom_call.1} parent=1 // pred_check_branch
      %67 = sbr.rel (0) target = $region41
    $region40: #{tpu_custom_call.1} parent=1 // pred_region
      %68 = dma.done [#allocation7], 2048
    $region41: #{tpu_custom_call.1} parent=1 // pred_fallthru
      _
    %s70 = smul.u32 0, 16
    %p71 = scmp.eq.s32.totalorder 0, 0
    // Predicated region
    $region42: #{tpu_custom_call.1} parent=1 // pred_check
      %p72 = pneg %p71
    $region43: #{tpu_custom_call.1} parent=1 // pred_check_branch
      %74 = sbr.rel (%p72) target = $region45
    $region44: #{tpu_custom_call.1} parent=1 // pred_region
      %s75 = sshra.s32 %s70, 3
      %s76 = sand.u32 %s70, 7
      %s77 = smul.u32 %s75, 2
      %s78 = smul.addr %s77, 8
      %s79 = scalar_lea.vmem [#allocation2], %s78
      %80 = vst [vmem:[%s79] sm:$0xff] 0.0
      %81 = vst [vmem:[%s79 + $0x8] sm:$0xff] 0.0
      %82 = vst [vmem:[%s79 + $0x10] sm:$0xff] 0.0
      %83 = vst [vmem:[%s79 + $0x18] sm:$0xff] 0.0
    $region45: #{tpu_custom_call.1} parent=1 // pred_fallthru
      _
    %s84 = sshra.s32 %s70, 3
    %s85 = sand.u32 %s70, 7
    %s86 = smul.u32 %s84, 2
    %s87 = smul.addr %s86, 8
    %s88 = scalar_lea.vmem [#allocation2], %s87
    %v89 = vld [vmem:[%s88] sm:$0xff]
    %v90 = vld [vmem:[%s88 + $0x8] sm:$0xff]
    %v91 = vld [vmem:[%s88 + $0x10] sm:$0xff]
    %v92 = vld [vmem:[%s88 + $0x18] sm:$0xff]
    %v93 = vld [vmem:[#allocation4] sm:$0xf]
    %v94 = vld [vmem:[#allocation4 + $0x4] sm:$0xf]
    %v95 = vld [vmem:[#allocation6] sm:$0xff]
    %v96 = vld [vmem:[#allocation6 + $0x8] sm:$0xff]
    %v97 = vld [vmem:[#allocation6 + $0x10] sm:$0xff]
    %v98 = vld [vmem:[#allocation6 + $0x18] sm:$0xff]
    %v99 = vld [vmem:[#allocation6 + $0x20] sm:$0xff]
    %v100 = vld [vmem:[#allocation6 + $0x28] sm:$0xff]
    %v101 = vld [vmem:[#allocation6 + $0x30] sm:$0xff]
    %v102 = vld [vmem:[#allocation6 + $0x38] sm:$0xff]
    %v103 = vld [vmem:[#allocation6 + $0x40] sm:$0xff]
    %v104 = vld [vmem:[#allocation6 + $0x48] sm:$0xff]
    %v105 = vld [vmem:[#allocation6 + $0x50] sm:$0xff]
    %v106 = vld [vmem:[#allocation6 + $0x58] sm:$0xff]
    %v107 = vld [vmem:[#allocation6 + $0x60] sm:$0xff]
    %v108 = vld [vmem:[#allocation6 + $0x68] sm:$0xff]
    %v109 = vld [vmem:[#allocation6 + $0x70] sm:$0xff]
    %v110 = vld [vmem:[#allocation6 + $0x78] sm:$0xff]
    %v113 = vunpack.c.l.b16 %v93
    %v114 = vunpack.c.l.b16 %v94
    %v115 = vpack.c.b16 %v114, %v113
    %v133 = vunpack.c.l.b16 %v95
    %v134 = vunpack.c.h.b16 %v95
    %v135 = vunpack.c.l.b16 %v96
    %v136 = vunpack.c.h.b16 %v96
    %v137 = vunpack.c.l.b16 %v97
    %v138 = vunpack.c.h.b16 %v97
    %v139 = vunpack.c.l.b16 %v98
    %v140 = vunpack.c.h.b16 %v98
    %v141 = vunpack.c.l.b16 %v99
    %v142 = vunpack.c.h.b16 %v99
    %v143 = vunpack.c.l.b16 %v100
    %v144 = vunpack.c.h.b16 %v100
    %v145 = vunpack.c.l.b16 %v101
    %v146 = vunpack.c.h.b16 %v101
    %v147 = vunpack.c.l.b16 %v102
    %v148 = vunpack.c.h.b16 %v102
    %v149 = vunpack.c.l.b16 %v103
    %v150 = vunpack.c.h.b16 %v103
    %v151 = vunpack.c.l.b16 %v104
    %v152 = vunpack.c.h.b16 %v104
    %v153 = vunpack.c.l.b16 %v105
    %v154 = vunpack.c.h.b16 %v105
    %v155 = vunpack.c.l.b16 %v106
    %v156 = vunpack.c.h.b16 %v106
    %v157 = vunpack.c.l.b16 %v107
    %v158 = vunpack.c.h.b16 %v107
    %v159 = vunpack.c.l.b16 %v108
    %v160 = vunpack.c.h.b16 %v108
    %v161 = vunpack.c.l.b16 %v109
    %v162 = vunpack.c.h.b16 %v109
    %v163 = vunpack.c.l.b16 %v110
    %v164 = vunpack.c.h.b16 %v110
    %v165 = vpack.c.b16 %v135, %v133
    %v166 = vpack.c.b16 %v136, %v134
    %v167 = vpack.c.b16 %v139, %v137
    %v168 = vpack.c.b16 %v140, %v138
    %v169 = vpack.c.b16 %v143, %v141
    %v170 = vpack.c.b16 %v144, %v142
    %v171 = vpack.c.b16 %v147, %v145
    %v172 = vpack.c.b16 %v148, %v146
    %v173 = vpack.c.b16 %v151, %v149
    %v174 = vpack.c.b16 %v152, %v150
    %v175 = vpack.c.b16 %v155, %v153
    %v176 = vpack.c.b16 %v156, %v154
    %v177 = vpack.c.b16 %v159, %v157
    %v178 = vpack.c.b16 %v160, %v158
    %v179 = vpack.c.b16 %v163, %v161
    %v180 = vpack.c.b16 %v164, %v162
    %197 = vmatprep.subr.bf16.mxu0 %v180
    %198 = vmatpush1.bf16.msra.mxu0 %v179
    %199 = vmatprep.subr.bf16.mxu0 %v178
    %200 = vmatpush1.bf16.msra.mxu0 %v177
    %201 = vmatprep.subr.bf16.mxu0 %v176
    %202 = vmatpush1.bf16.msra.mxu0 %v175
    %203 = vmatprep.subr.bf16.mxu0 %v174
    %204 = vmatpush1.bf16.msra.mxu0 %v173
    %205 = vmatprep.subr.bf16.mxu0 %v172
    %206 = vmatpush1.bf16.msra.mxu0 %v171
    %207 = vmatprep.subr.bf16.mxu0 %v170
    %208 = vmatpush1.bf16.msra.mxu0 %v169
    %209 = vmatprep.subr.bf16.mxu0 %v168
    %210 = vmatpush1.bf16.msra.mxu0 %v167
    %211 = vmatprep.subr.bf16.mxu0 %v166
    %212 = vmatpush1.bf16.msra.mxu0 %v165
    %213 = vmatprep.subr.bf16.mxu0 0
    %214 = vmatpush2.bf16.msra.mxu0 0
    %215 = vmatprep.subr.bf16.mxu0 0
    %216 = vmatpush2.bf16.msra.mxu0 0
    %217 = vmatprep.subr.bf16.mxu0 0
    %218 = vmatpush2.bf16.msra.mxu0 0
    %219 = vmatprep.subr.bf16.mxu0 0
    %220 = vmatpush2.bf16.msra.mxu0 0
    %221 = vmatprep.subr.bf16.mxu0 0
    %222 = vmatpush2.bf16.msra.mxu0 0
    %223 = vmatprep.subr.bf16.mxu0 0
    %224 = vmatpush2.bf16.msra.mxu0 0
    %225 = vmatprep.subr.bf16.mxu0 0
    %226 = vmatpush2.bf16.msra.mxu0 0
    %227 = vmatprep.subr.bf16.mxu0 0
    %228 = vmatpush2.bf16.msra.mxu0 0
    %229 = vmatprep.mubr.bf16.mxu0 0
    %230 = vmatmul.mubr.bf16.gmra.mxu0 %v115
    %v231 = vpop.f32.mrf.mxu0
    %v232 = vadd.f32 0.0, %v231
    %v233 = vpop.f32.mrf.mxu0
    %v234 = vadd.f32 0.0, %v233
    %v235 = vpop.f32.mrf.mxu0
    %v236 = vadd.f32 0.0, %v235
    %v237 = vpop.f32.mrf.mxu0
    %v238 = vadd.f32 0.0, %v237
    %239 = vdwg.mxu0
    %v240 = vadd.f32 %v89, %v232
    %v241 = vadd.f32 %v90, %v234
    %v242 = vadd.f32 %v91, %v236
    %v243 = vadd.f32 %v92, %v238
    %244 = vst [vmem:[%s88] sm:$0xff] %v240
    %245 = vst [vmem:[%s88 + $0x8] sm:$0xff] %v241
    %246 = vst [vmem:[%s88 + $0x10] sm:$0xff] %v242
    %247 = vst [vmem:[%s88 + $0x18] sm:$0xff] %v243
    // Predicated region
    $region46: #{tpu_custom_call.1} parent=1 // pred_check
      %p248 = pneg %p71
    $region47: #{tpu_custom_call.1} parent=1 // pred_check_branch
      %250 = sbr.rel (%p248) target = $region49
    $region48: #{tpu_custom_call.1} parent=1 // pred_region
      %v251 = vld [vmem:[%s88] sm:$0xff]
      %v252 = vld [vmem:[%s88 + $0x8] sm:$0xff]
      %v253 = vld [vmem:[%s88 + $0x10] sm:$0xff]
      %v254 = vld [vmem:[%s88 + $0x18] sm:$0xff]
      %v255 = vld [vmem:[%s2] sm:$0x3]
      %v257 = vlaneseq
      %v258 = vshrl.u32 %v257, 7
      %v259 = vsub.s32 0, %v258
      %v260 = vrot.slane %v255, %v259
      %v261 = vlaneseq
      %v262 = vshrl.u32 %v261, 7
      %v263 = vsub.s32 1, %v262
      %v264 = vrot.slane %v255, %v263
      %v267 = vadd.f32 %v251, %v260
      %v268 = vadd.f32 %v252, %v264
      %v269 = vadd.f32 %v253, %v260
      %v270 = vadd.f32 %v254, %v264
      %v271 = vmax.f32 %v267, 0.0
      %v272 = vmax.f32 %v268, 0.0
      %v273 = vmax.f32 %v269, 0.0
      %v274 = vmax.f32 %v270, 0.0
      %v275 = vpack.c.bf16 %v273, %v271
      %v276 = vpack.c.bf16 %v274, %v272
      %v277 = vld [vmem:[#allocation8] sm:$0xf]
      %v278 = vld [vmem:[#allocation8 + $0x4] sm:$0xf]
      %v279 = vld [vmem:[#allocation8 + $0x8] sm:$0xf]
      %v280 = vld [vmem:[#allocation8 + $0xc] sm:$0xf]
      %v281 = vld [vmem:[#allocation8 + $0x10] sm:$0xf]
      %v282 = vld [vmem:[#allocation8 + $0x14] sm:$0xf]
      %v283 = vld [vmem:[#allocation8 + $0x18] sm:$0xf]
      %v284 = vld [vmem:[#allocation8 + $0x1c] sm:$0xf]
      %v285 = vld [vmem:[#allocation8 + $0x20] sm:$0xf]
      %v286 = vld [vmem:[#allocation8 + $0x24] sm:$0xf]
      %v287 = vld [vmem:[#allocation8 + $0x28] sm:$0xf]
      %v288 = vld [vmem:[#allocation8 + $0x2c] sm:$0xf]
      %v289 = vld [vmem:[#allocation8 + $0x30] sm:$0xf]
      %v290 = vld [vmem:[#allocation8 + $0x34] sm:$0xf]
      %v291 = vld [vmem:[#allocation8 + $0x38] sm:$0xf]
      %v292 = vld [vmem:[#allocation8 + $0x3c] sm:$0xf]
      %v293 = vld [vmem:[#allocation8 + $0x40] sm:$0xf]
      %v294 = vld [vmem:[#allocation8 + $0x44] sm:$0xf]
      %v295 = vld [vmem:[#allocation8 + $0x48] sm:$0xf]
      %v296 = vld [vmem:[#allocation8 + $0x4c] sm:$0xf]
      %v297 = vld [vmem:[#allocation8 + $0x50] sm:$0xf]
      %v298 = vld [vmem:[#allocation8 + $0x54] sm:$0xf]
      %v299 = vld [vmem:[#allocation8 + $0x58] sm:$0xf]
      %v300 = vld [vmem:[#allocation8 + $0x5c] sm:$0xf]
      %v301 = vld [vmem:[#allocation8 + $0x60] sm:$0xf]
      %v302 = vld [vmem:[#allocation8 + $0x64] sm:$0xf]
      %v303 = vld [vmem:[#allocation8 + $0x68] sm:$0xf]
      %v304 = vld [vmem:[#allocation8 + $0x6c] sm:$0xf]
      %v305 = vld [vmem:[#allocation8 + $0x70] sm:$0xf]
      %v306 = vld [vmem:[#allocation8 + $0x74] sm:$0xf]
      %v307 = vld [vmem:[#allocation8 + $0x78] sm:$0xf]
      %v308 = vld [vmem:[#allocation8 + $0x7c] sm:$0xf]
      %v309 = vld [vmem:[%s4] sm:$0x1]
      %v311 = vlaneseq
      %v312 = vshrl.u32 %v311, 7
      %v313 = vsub.s32 0, %v312
      %v314 = vrot.slane %v309, %v313
      %v348 = vunpack.c.l.b16 %v277
      %v349 = vunpack.c.l.b16 %v278
      %v350 = vunpack.c.l.b16 %v279
      %v351 = vunpack.c.l.b16 %v280
      %v352 = vunpack.c.l.b16 %v281
      %v353 = vunpack.c.l.b16 %v282
      %v354 = vunpack.c.l.b16 %v283
      %v355 = vunpack.c.l.b16 %v284
      %v356 = vunpack.c.l.b16 %v285
      %v357 = vunpack.c.l.b16 %v286
      %v358 = vunpack.c.l.b16 %v287
      %v359 = vunpack.c.l.b16 %v288
      %v360 = vunpack.c.l.b16 %v289
      %v361 = vunpack.c.l.b16 %v290
      %v362 = vunpack.c.l.b16 %v291
      %v363 = vunpack.c.l.b16 %v292
      %v364 = vunpack.c.l.b16 %v293
      %v365 = vunpack.c.l.b16 %v294
      %v366 = vunpack.c.l.b16 %v295
      %v367 = vunpack.c.l.b16 %v296
      %v368 = vunpack.c.l.b16 %v297
      %v369 = vunpack.c.l.b16 %v298
      %v370 = vunpack.c.l.b16 %v299
      %v371 = vunpack.c.l.b16 %v300
      %v372 = vunpack.c.l.b16 %v301
      %v373 = vunpack.c.l.b16 %v302
      %v374 = vunpack.c.l.b16 %v303
      %v375 = vunpack.c.l.b16 %v304
      %v376 = vunpack.c.l.b16 %v305
      %v377 = vunpack.c.l.b16 %v306
      %v378 = vunpack.c.l.b16 %v307
      %v379 = vunpack.c.l.b16 %v308
      %v380 = vpack.c.b16 %v349, %v348
      %v381 = vpack.c.b16 %v351, %v350
      %v382 = vpack.c.b16 %v353, %v352
      %v383 = vpack.c.b16 %v355, %v354
      %v384 = vpack.c.b16 %v357, %v356
      %v385 = vpack.c.b16 %v359, %v358
      %v386 = vpack.c.b16 %v361, %v360
      %v387 = vpack.c.b16 %v363, %v362
      %v388 = vpack.c.b16 %v365, %v364
      %v389 = vpack.c.b16 %v367, %v366
      %v390 = vpack.c.b16 %v369, %v368
      %v391 = vpack.c.b16 %v371, %v370
      %v392 = vpack.c.b16 %v373, %v372
      %v393 = vpack.c.b16 %v375, %v374
      %v394 = vpack.c.b16 %v377, %v376
      %v395 = vpack.c.b16 %v379, %v378
      %412 = vmatprep.subr.bf16.mxu0 0
      %413 = vmatpush1.bf16.msra.mxu0 %v387
      %414 = vmatprep.subr.bf16.mxu0 0
      %415 = vmatpush1.bf16.msra.mxu0 %v386
      %416 = vmatprep.subr.bf16.mxu0 0
      %417 = vmatpush1.bf16.msra.mxu0 %v385
      %418 = vmatprep.subr.bf16.mxu0 0
      %419 = vmatpush1.bf16.msra.mxu0 %v384
      %420 = vmatprep.subr.bf16.mxu0 0
      %421 = vmatpush1.bf16.msra.mxu0 %v383
      %422 = vmatprep.subr.bf16.mxu0 0
      %423 = vmatpush1.bf16.msra.mxu0 %v382
      %424 = vmatprep.subr.bf16.mxu0 0
      %425 = vmatpush1.bf16.msra.mxu0 %v381
      %426 = vmatprep.subr.bf16.mxu0 0
      %427 = vmatpush1.bf16.msra.mxu0 %v380
      %428 = vmatprep.subr.bf16.mxu0 0
      %429 = vmatpush2.bf16.msra.mxu0 %v395
      %430 = vmatprep.subr.bf16.mxu0 0
      %431 = vmatpush2.bf16.msra.mxu0 %v394
      %432 = vmatprep.subr.bf16.mxu0 0
      %433 = vmatpush2.bf16.msra.mxu0 %v393
      %434 = vmatprep.subr.bf16.mxu0 0
      %435 = vmatpush2.bf16.msra.mxu0 %v392
      %436 = vmatprep.subr.bf16.mxu0 0
      %437 = vmatpush2.bf16.msra.mxu0 %v391
      %438 = vmatprep.subr.bf16.mxu0 0
      %439 = vmatpush2.bf16.msra.mxu0 %v390
      %440 = vmatprep.subr.bf16.mxu0 0
      %441 = vmatpush2.bf16.msra.mxu0 %v389
      %442 = vmatprep.subr.bf16.mxu0 0
      %443 = vmatpush2.bf16.msra.mxu0 %v388
      %444 = vmatprep.mubr.bf16.mxu0 %v276
      %445 = vmatmul.mubr.bf16.gmra.mxu0 %v275
      %v446 = vpop.f32.mrf.mxu0
      %v447 = vadd.f32 %v314, %v446
      %v448 = vpop.f32.mrf.mxu0
      %v449 = vpop.f32.mrf.mxu0
      %v450 = vadd.f32 %v314, %v449
      %v451 = vpop.f32.mrf.mxu0
      %452 = vdwg.mxu0
      %v453 = vmax.f32 %v447, 0.0
      %v454 = vmax.f32 %v450, 0.0
      %v455 = vld [vmem:[%s5] sm:$0x1]
      %v457 = vlaneseq
      %v458 = vshrl.u32 %v457, 7
      %v459 = vsub.s32 0, %v458
      %v460 = vrot.slane %v455, %v459
      %v462 = vmul.f32 %v453, %v460
      %v463 = vmul.f32 %v454, %v460
      %464 = vadd.xlane.f32.xlu0 %v462
      %v465 = vpop.xlane.xlu0 %464
      %466 = vadd.xlane.f32.xlu0 %v463
      %v467 = vpop.xlane.xlu0 %466
      %v468 = vld [vmem:[#allocation3] sm:$0x1]
      %v470 = vlaneseq
      %v471 = vshrl.u32 %v470, 7
      %v472 = vsub.s32 0, %v471
      %v473 = vrot.slane %v468, %v472
      %v475 = vadd.f32 %v465, %v473
      %v476 = vadd.f32 %v467, %v473
      %s477 = scalar_lea.vmem %s7, %s70
      %vm478 = vcmask 7168
      %479 = vst.msk [vmem:[%s477] sm:$0xff] %vm478, %v475
      %480 = vst.msk [vmem:[%s477 + $0x8] sm:$0xff] %vm478, %v476
    $region49: #{tpu_custom_call.1} parent=1 // pred_fallthru
      _
    // Predicated region
    $region50: #{tpu_custom_call.1} parent=1 // pred_check
      _
    $region51: #{tpu_custom_call.1} parent=1 // pred_check_branch
      %482 = sbr.rel (0) target = $region53
    $region52: #{tpu_custom_call.1} parent=1 // pred_region
      _
    $region53: #{tpu_custom_call.1} parent=1 // pred_fallthru
      _
    // Predicated region
    $region54: #{tpu_custom_call.1} parent=1 // pred_check
      _
    $region55: #{tpu_custom_call.1} parent=1 // pred_check_branch
      %484 = sbr.rel (0) target = $region57
    $region56: #{tpu_custom_call.1} parent=1 // pred_region
      _
    $region57: #{tpu_custom_call.1} parent=1 // pred_fallthru
      _
    %485 = vsyncpa [#allocation5], 1
    %486 = vsyncpa [#allocation7], 1

</llo_original>
